<compile_context>
chip_gen: v7x
topology: tpu7x:2x2x1
jax: 0.10.0
libtpu: 0.0.40
codegen_flags: <defaults>
</compile_context>

<pallas_src>
import functools

import jax
import jax.numpy as jnp
from jax.experimental import pallas as pl
from jax.experimental.pallas import tpu as pltpu


def _round_up(x, m):
    return ((x + m - 1) // m) * m


def mlp_kernel(x_ref, w1_ref, b1_ref, w2_ref, b2_ref, w3_ref, b3_ref, o_ref):
    # Fused forward: bf16 MXU matmuls with f32 accumulation; bias/ReLU in f32.
    x = x_ref[...].astype(jnp.bfloat16)                                # in-kernel cast (VPU slack)
    h1 = jnp.dot(x, w1_ref[...], preferred_element_type=jnp.float32) + b1_ref[...]
    h1 = jnp.maximum(h1, 0.0).astype(jnp.bfloat16)
    h2 = jnp.dot(h1, w2_ref[...], preferred_element_type=jnp.float32) + b2_ref[...]
    h2 = jnp.maximum(h2, 0.0).astype(jnp.bfloat16)
    logits = jnp.dot(h2, w3_ref[...], preferred_element_type=jnp.float32) + b3_ref[...]
    o_ref[...] = logits.astype(o_ref.dtype)                            # slim (block_b, out_dim) store


def pack_params(w1, b1, w2, b2, w3, b3):
    """One-time parameter packing: matmul operands in bf16, biases stay f32."""
    return (w1.astype(jnp.bfloat16), b1,
            w2.astype(jnp.bfloat16), b2,
            w3.astype(jnp.bfloat16), b3)


@functools.partial(jax.jit, static_argnames=("block_b",))
def simple_net_forward(x, w1, b1, w2, b2, w3, b3, *, block_b=8192):
    B, in_dim = x.shape
    h1_dim = w1.shape[1]
    h2_dim = w2.shape[1]
    out_dim = w3.shape[1]

    # Batch tile choice:
    #  - tiny B: single full tile (block second-to-last dim == array dim is allowed).
    #  - otherwise: multiple of 8, capped so there are >=2 grid steps (v7x megacore
    #    sharding + pipelining), and at most block_b (amortizes per-step overhead).
    if B <= 8:
        block_b = B
    else:
        block_b = min(block_b, _round_up(pl.cdiv(B, 2), 8))
    grid_b = pl.cdiv(B, block_b)

    in_specs = [
        pl.BlockSpec((block_b, in_dim), lambda i: (i, 0)),             # x tile over batch (f32)
        pl.BlockSpec(w1.shape, lambda i: (0, 0)),                      # W1 resident (bf16)
        pl.BlockSpec(b1.shape, lambda i: (0, 0)),                      # b1 (1, 64) f32
        pl.BlockSpec(w2.shape, lambda i: (0, 0)),                      # W2 (bf16)
        pl.BlockSpec(b2.shape, lambda i: (0, 0)),                      # b2 (1, 32) f32
        pl.BlockSpec(w3.shape, lambda i: (0, 0)),                      # W3 (32, out_dim) bf16
        pl.BlockSpec(b3.shape, lambda i: (0, 0)),                      # b3 (1, out_dim) f32
    ]
    out_spec = pl.BlockSpec((block_b, out_dim), lambda i: (i, 0))      # unpadded output tile

    flops = 2 * B * (in_dim * h1_dim + h1_dim * h2_dim + h2_dim * out_dim)
    bytes_accessed = (
        B * in_dim * 4                      # x (f32, cast in-kernel)
        + B * out_dim * 4                   # output (f32, unpadded)
        + (in_dim * h1_dim + h1_dim * h2_dim + h2_dim * out_dim) * 2   # weights (bf16)
        + (h1_dim + h2_dim + out_dim) * 4   # biases (f32)
    )

    return pl.pallas_call(
        mlp_kernel,
        out_shape=jax.ShapeDtypeStruct((B, out_dim), jnp.float32),
        grid_spec=pltpu.PrefetchScalarGridSpec(
            num_scalar_prefetch=0,
            grid=(grid_b,),
            in_specs=in_specs,
            out_specs=out_spec,
        ),
        compiler_params=pltpu.CompilerParams(
            dimension_semantics=("parallel",),
            vmem_limit_bytes=32 * 1024 * 1024,
        ),
        cost_estimate=pl.CostEstimate(
            flops=flops, transcendentals=0, bytes_accessed=bytes_accessed
        ),
    )(x, w1, b1, w2, b2, w3, b3)


def init_params(key, in_shape, out_shape):
    """Deterministic init matching nn.Linear layer shapes (weights stored transposed)."""
    k1, k2, k3, k4, k5, k6 = jax.random.split(key, 6)

    def linear_init(kw, kb, fan_in, fan_out):
        # torch.nn.Linear default-ish: U(-1/sqrt(fan_in), 1/sqrt(fan_in))
        bound = 1.0 / jnp.sqrt(fan_in)
        w = jax.random.uniform(kw, (fan_in, fan_out), jnp.float32, -bound, bound)
        b = jax.random.uniform(kb, (1, fan_out), jnp.float32, -bound, bound)
        return w, b

    w1, b1 = linear_init(k1, k2, in_shape, 64)
    w2, b2 = linear_init(k3, k4, 64, 32)
    w3, b3 = linear_init(k5, k6, 32, out_shape)
    return w1, b1, w2, b2, w3, b3


def reference_forward(x, w1, b1, w2, b2, w3, b3):
    h1 = jnp.maximum(x @ w1 + b1, 0.0)
    h2 = jnp.maximum(h1 @ w2 + b2, 0.0)
    return h2 @ w3 + b3


if __name__ == "__main__":
    key = jax.random.PRNGKey(0)
    kx, kp, kx2 = jax.random.split(key, 3)

    # Small shapes consistent with SimpleNet(in_shape, out_shape): tabular features.
    batch, in_shape, out_shape = 8, 16, 2
    params = init_params(kp, in_shape, out_shape)
    packed = pack_params(*params)   # one-time bf16 weight packing (out of the hot path)

    # 1) Small-batch check (single grid step).
    x = jax.random.normal(kx, (batch, in_shape), dtype=jnp.float32)
    out = jax.block_until_ready(simple_net_forward(x, *packed))
    ref = reference_forward(x, *params)
    assert out.shape == (batch, out_shape)
    # bf16 matmul operands with f32 accumulation -> loosened tolerance vs f32 reference.
    assert jnp.allclose(out, ref, atol=3e-2, rtol=3e-2), "mismatch vs pure-JAX reference (small B)"

    # 2) Larger-batch check exercising the tiled, multi-step (pipelined / megacore) grid path.
    big_batch = 4096
    x_big = jax.random.normal(kx2, (big_batch, in_shape), dtype=jnp.float32)
    out_big = jax.block_until_ready(simple_net_forward(x_big, *packed))
    ref_big = reference_forward(x_big, *params)
    assert out_big.shape == (big_batch, out_shape)
    assert jnp.allclose(out_big, ref_big, atol=3e-2, rtol=3e-2), "mismatch vs pure-JAX reference (big B)"

    print("KERNEL_OK")
</pallas_src>

<mosaic_0001>
module attributes {stable_mosaic.version = 11 : i64} {
  func.func @mlp_kernel(%arg0: i32, %arg1: memref<8x16xf32, #tpu.memory_space<vmem>>, %arg2: memref<16x64xbf16, #tpu.memory_space<vmem>>, %arg3: memref<1x64xf32, #tpu.memory_space<vmem>>, %arg4: memref<64x32xbf16, #tpu.memory_space<vmem>>, %arg5: memref<1x32xf32, #tpu.memory_space<vmem>>, %arg6: memref<32x2xbf16, #tpu.memory_space<vmem>>, %arg7: memref<1x2xf32, #tpu.memory_space<vmem>>, %arg8: memref<8x2xf32, #tpu.memory_space<vmem>>) attributes {dimension_semantics = [#tpu.dimension_semantics<parallel>], iteration_bounds = array<i64: 1>, scalar_prefetch = 0 : i64, scratch_operands = 0 : i64, tpu.core_type = #tpu.core_type<tc>, window_params = [{transform_indices = @transform_0, window_bounds = array<i64: 8, 16>}, {pipeline_mode = #tpu.pipeline_mode<synchronous>, transform_indices = @transform_1, window_bounds = array<i64: 16, 64>}, {pipeline_mode = #tpu.pipeline_mode<synchronous>, transform_indices = @transform_2, window_bounds = array<i64: 1, 64>}, {pipeline_mode = #tpu.pipeline_mode<synchronous>, transform_indices = @transform_3, window_bounds = array<i64: 64, 32>}, {pipeline_mode = #tpu.pipeline_mode<synchronous>, transform_indices = @transform_4, window_bounds = array<i64: 1, 32>}, {pipeline_mode = #tpu.pipeline_mode<synchronous>, transform_indices = @transform_5, window_bounds = array<i64: 32, 2>}, {pipeline_mode = #tpu.pipeline_mode<synchronous>, transform_indices = @transform_6, window_bounds = array<i64: 1, 2>}, {transform_indices = @transform_7, window_bounds = array<i64: 8, 2>}]} {
    %c0 = arith.constant 0 : index
    %c0_0 = arith.constant 0 : index
    %0 = vector.load %arg1[%c0, %c0_0] : memref<8x16xf32, #tpu.memory_space<vmem>>, vector<8x16xf32>
    %1 = arith.truncf %0 : vector<8x16xf32> to vector<8x16xbf16>
    %c0_1 = arith.constant 0 : index
    %c0_2 = arith.constant 0 : index
    %2 = vector.load %arg2[%c0_1, %c0_2] : memref<16x64xbf16, #tpu.memory_space<vmem>>, vector<16x64xbf16>
    %cst = arith.constant dense<0.000000e+00> : vector<8x64xf32>
    %3 = tpu.matmul %1, %2, %cst {dimension_numbers = #tpu.dot_dimension_numbers<[1], [0], [0], [1], [0, 0, 1, 1], [], []>} : vector<8x16xbf16>, vector<16x64xbf16>, vector<8x64xf32> -> vector<8x64xf32>
    %c0_3 = arith.constant 0 : index
    %c0_4 = arith.constant 0 : index
    %4 = vector.load %arg3[%c0_3, %c0_4] : memref<1x64xf32, #tpu.memory_space<vmem>>, vector<1x64xf32>
    %5 = vector.broadcast %4 : vector<1x64xf32> to vector<8x64xf32>
    %6 = arith.addf %3, %5 : vector<8x64xf32>
    %cst_5 = arith.constant 0.000000e+00 : f32
    %7 = vector.broadcast %cst_5 : f32 to vector<8x64xf32>
    %8 = arith.maximumf %6, %7 : vector<8x64xf32>
    %9 = arith.truncf %8 : vector<8x64xf32> to vector<8x64xbf16>
    %c0_6 = arith.constant 0 : index
    %c0_7 = arith.constant 0 : index
    %10 = vector.load %arg4[%c0_6, %c0_7] : memref<64x32xbf16, #tpu.memory_space<vmem>>, vector<64x32xbf16>
    %cst_8 = arith.constant dense<0.000000e+00> : vector<8x32xf32>
    %11 = tpu.matmul %9, %10, %cst_8 {dimension_numbers = #tpu.dot_dimension_numbers<[1], [0], [0], [1], [0, 0, 1, 1], [], []>} : vector<8x64xbf16>, vector<64x32xbf16>, vector<8x32xf32> -> vector<8x32xf32>
    %c0_9 = arith.constant 0 : index
    %c0_10 = arith.constant 0 : index
    %12 = vector.load %arg5[%c0_9, %c0_10] : memref<1x32xf32, #tpu.memory_space<vmem>>, vector<1x32xf32>
    %13 = vector.broadcast %12 : vector<1x32xf32> to vector<8x32xf32>
    %14 = arith.addf %11, %13 : vector<8x32xf32>
    %cst_11 = arith.constant 0.000000e+00 : f32
    %15 = vector.broadcast %cst_11 : f32 to vector<8x32xf32>
    %16 = arith.maximumf %14, %15 : vector<8x32xf32>
    %17 = arith.truncf %16 : vector<8x32xf32> to vector<8x32xbf16>
    %c0_12 = arith.constant 0 : index
    %c0_13 = arith.constant 0 : index
    %18 = vector.load %arg6[%c0_12, %c0_13] : memref<32x2xbf16, #tpu.memory_space<vmem>>, vector<32x2xbf16>
    %cst_14 = arith.constant dense<0.000000e+00> : vector<8x2xf32>
    %19 = tpu.matmul %17, %18, %cst_14 {dimension_numbers = #tpu.dot_dimension_numbers<[1], [0], [0], [1], [0, 0, 1, 1], [], []>} : vector<8x32xbf16>, vector<32x2xbf16>, vector<8x2xf32> -> vector<8x2xf32>
    %c0_15 = arith.constant 0 : index
    %c0_16 = arith.constant 0 : index
    %20 = vector.load %arg7[%c0_15, %c0_16] : memref<1x2xf32, #tpu.memory_space<vmem>>, vector<1x2xf32>
    %21 = vector.broadcast %20 : vector<1x2xf32> to vector<8x2xf32>
    %22 = arith.addf %19, %21 : vector<8x2xf32>
    %c0_17 = arith.constant 0 : index
    %c0_18 = arith.constant 0 : index
    %23 = vector.load %arg8[%c0_17, %c0_18] : memref<8x2xf32, #tpu.memory_space<vmem>>, vector<8x2xf32>
    tpu.vector_store %arg8[%c0_17, %c0_18], %22 {strides = array<i32>} : memref<8x2xf32, #tpu.memory_space<vmem>>, vector<8x2xf32>,
    return
  }
  func.func @transform_0(%arg0: i32) -> (i32, i32) {
    %c0_i32 = arith.constant 0 : i32
    %c0_i32_0 = arith.constant 0 : i32
    return %arg0, %c0_i32 : i32, i32
  }
  func.func @transform_1(%arg0: i32) -> (i32, i32) {
    %c0_i32 = arith.constant 0 : i32
    %c0_i32_0 = arith.constant 0 : i32
    %c0_i32_1 = arith.constant 0 : i32
    return %c0_i32, %c0_i32_0 : i32, i32
  }
  func.func @transform_2(%arg0: i32) -> (i32, i32) {
    %c0_i32 = arith.constant 0 : i32
    %c0_i32_0 = arith.constant 0 : i32
    %c0_i32_1 = arith.constant 0 : i32
    return %c0_i32, %c0_i32_0 : i32, i32
  }
  func.func @transform_3(%arg0: i32) -> (i32, i32) {
    %c0_i32 = arith.constant 0 : i32
    %c0_i32_0 = arith.constant 0 : i32
    %c0_i32_1 = arith.constant 0 : i32
    return %c0_i32, %c0_i32_0 : i32, i32
  }
  func.func @transform_4(%arg0: i32) -> (i32, i32) {
    %c0_i32 = arith.constant 0 : i32
    %c0_i32_0 = arith.constant 0 : i32
    %c0_i32_1 = arith.constant 0 : i32
    return %c0_i32, %c0_i32_0 : i32, i32
  }
  func.func @transform_5(%arg0: i32) -> (i32, i32) {
    %c0_i32 = arith.constant 0 : i32
    %c0_i32_0 = arith.constant 0 : i32
    %c0_i32_1 = arith.constant 0 : i32
    return %c0_i32, %c0_i32_0 : i32, i32
  }
  func.func @transform_6(%arg0: i32) -> (i32, i32) {
    %c0_i32 = arith.constant 0 : i32
    %c0_i32_0 = arith.constant 0 : i32
    %c0_i32_1 = arith.constant 0 : i32
    return %c0_i32, %c0_i32_0 : i32, i32
  }
  func.func @transform_7(%arg0: i32) -> (i32, i32) {
    %c0_i32 = arith.constant 0 : i32
    %c0_i32_0 = arith.constant 0 : i32
    return %arg0, %c0_i32 : i32, i32
  }
}

</mosaic_0001>

<llo_original>
// kernel: simple_net_forward.1
$region0: #{simple_net_forward.1}
  #allocation0 [shape = 'u32[]', space=smem, size = 0x4, offset = 0x4, fixed_abs, tag = 'smem constant byte address 0x4 - core index']
  #allocation1 [shape = 'u32[144,128]{1,0:T(1,128)}', space=vmem, size = 0x12000, scoped, tag = 'internal scratch']
  %s0 = inlined_call_operand.vmem [shape: f32[8,16], index: 0, kind: input, shape index: {}]
  %s1 = inlined_call_operand.vmem [shape: bf16[16,64], index: 1, kind: input, shape index: {}]
  %s2 = inlined_call_operand.vmem [shape: f32[1,64], index: 2, kind: input, shape index: {}]
  %s3 = inlined_call_operand.vmem [shape: bf16[64,32], index: 3, kind: input, shape index: {}]
  %s4 = inlined_call_operand.vmem [shape: f32[1,32], index: 4, kind: input, shape index: {}]
  %s5 = inlined_call_operand.vmem [shape: bf16[32,2], index: 5, kind: input, shape index: {}]
  %s6 = inlined_call_operand.vmem [shape: f32[1,2], index: 6, kind: input, shape index: {}]
  %s7 = inlined_call_operand.vmem [shape: f32[8,2], index: 7, kind: output, shape index: {}]
  %s8 = sld [smem:[#allocation0]]
  $region38: #{simple_net_forward.1} parent=0
    _
  %s10 = ssub.s32 1, %s8
  %s11 = scalar_select 0, %s10, %s8
  // Predicated region
  $region2: #{simple_net_forward.1} parent=0 // pred_check
    _
  $region3: #{simple_net_forward.1} parent=0 // pred_check_branch
    %13 = sbr.rel (0) target = $region5
  $region4: #{simple_net_forward.1} parent=0 // pred_region
    _
  $region5: #{simple_net_forward.1} parent=0 // pred_fallthru
    _
  // Predicated region
  $region6: #{simple_net_forward.1} parent=0 // pred_check
    _
  $region7: #{simple_net_forward.1} parent=0 // pred_check_branch
    %15 = sbr.rel (0) target = $region9
  $region8: #{simple_net_forward.1} parent=0 // pred_region
    _
  $region9: #{simple_net_forward.1} parent=0 // pred_fallthru
    _
  // Predicated region
  $region10: #{simple_net_forward.1} parent=0 // pred_check
    _
  $region11: #{simple_net_forward.1} parent=0 // pred_check_branch
    %17 = sbr.rel (0) target = $region13
  $region12: #{simple_net_forward.1} parent=0 // pred_region
    _
  $region13: #{simple_net_forward.1} parent=0 // pred_fallthru
    _
  // Predicated region
  $region14: #{simple_net_forward.1} parent=0 // pred_check
    _
  $region15: #{simple_net_forward.1} parent=0 // pred_check_branch
    %19 = sbr.rel (0) target = $region17
  $region16: #{simple_net_forward.1} parent=0 // pred_region
    _
  $region17: #{simple_net_forward.1} parent=0 // pred_fallthru
    _
  // Predicated region
  $region18: #{simple_net_forward.1} parent=0 // pred_check
    _
  $region19: #{simple_net_forward.1} parent=0 // pred_check_branch
    %21 = sbr.rel (0) target = $region21
  $region20: #{simple_net_forward.1} parent=0 // pred_region
    _
  $region21: #{simple_net_forward.1} parent=0 // pred_fallthru
    _
  // Predicated region
  $region22: #{simple_net_forward.1} parent=0 // pred_check
    _
  $region23: #{simple_net_forward.1} parent=0 // pred_check_branch
    %23 = sbr.rel (0) target = $region25
  $region24: #{simple_net_forward.1} parent=0 // pred_region
    _
  $region25: #{simple_net_forward.1} parent=0 // pred_fallthru
    _
  // Predicated region
  $region26: #{simple_net_forward.1} parent=0 // pred_check
    _
  $region27: #{simple_net_forward.1} parent=0 // pred_check_branch
    %25 = sbr.rel (0) target = $region29
  $region28: #{simple_net_forward.1} parent=0 // pred_region
    _
  $region29: #{simple_net_forward.1} parent=0 // pred_fallthru
    _
  %v27 = vld [vmem:[%s0] sm:$0xff]
  %v28 = vpack.c.bf16 %v27, %v27
  %v29 = vld [vmem:[%s1] sm:$0xf]
  %v30 = vld [vmem:[%s1 + $0x4] sm:$0xf]
  %v31 = vld [vmem:[%s2] sm:$0x1]
  %v33 = vlaneseq
  %v34 = vshrl.u32 %v33, 7
  %v35 = vsub.s32 0, %v34
  %v36 = vrot.slane %v31, %v35
  %v40 = vunpack.c.l.b16 %v29
  %v41 = vunpack.c.l.b16 %v30
  %v42 = vpack.c.b16 %v41, %v40
  %vm44 = vcmask 130048
  %v46 = vsel %vm44, %v28, 0
  %48 = vmatprep.subr.bf16.mxu0 0
  %49 = vmatpush1.bf16.msra.mxu0 %v42
  %50 = vmatprep.subr.bf16.mxu0 0
  %51 = vmatpush1.bf16.msra.mxu0 0
  %52 = vmatprep.subr.bf16.mxu0 0
  %53 = vmatpush1.bf16.msra.mxu0 0
  %54 = vmatprep.subr.bf16.mxu0 0
  %55 = vmatpush1.bf16.msra.mxu0 0
  %56 = vmatprep.subr.bf16.mxu0 0
  %57 = vmatpush1.bf16.msra.mxu0 0
  %58 = vmatprep.subr.bf16.mxu0 0
  %59 = vmatpush1.bf16.msra.mxu0 0
  %60 = vmatprep.subr.bf16.mxu0 0
  %61 = vmatpush1.bf16.msra.mxu0 0
  %62 = vmatprep.subr.bf16.mxu0 0
  %63 = vmatpush1.bf16.msra.mxu0 0
  %64 = vmatprep.subr.bf16.mxu0 0
  %65 = vmatpush1.bf16.msra.mxu0 0
  %66 = vmatprep.subr.bf16.mxu0 0
  %67 = vmatpush1.bf16.msra.mxu0 0
  %68 = vmatprep.subr.bf16.mxu0 0
  %69 = vmatpush1.bf16.msra.mxu0 0
  %70 = vmatprep.subr.bf16.mxu0 0
  %71 = vmatpush1.bf16.msra.mxu0 0
  %72 = vmatprep.subr.bf16.mxu0 0
  %73 = vmatpush1.bf16.msra.mxu0 0
  %74 = vmatprep.subr.bf16.mxu0 0
  %75 = vmatpush1.bf16.msra.mxu0 0
  %76 = vmatprep.subr.bf16.mxu0 0
  %77 = vmatpush1.bf16.msra.mxu0 0
  %78 = vmatprep.subr.bf16.mxu0 0
  %79 = vmatpush1.bf16.msra.mxu0 0
  %80 = vmatprep.mubr.bf16.mxu0 0
  %81 = vmatmul.mubr.bf16.gmra.mrb[0].mxu0 %v46
  %v82 = vpop.f32.mrb[0].mxu0
  %v83 = vadd.f32 %v36, %v82
  %v84 = vpop.f32.mrb[0].mxu0
  %v85 = vpop.f32.mrb[0].mxu0
  %v86 = vpop.f32.mrb[0].mxu0
  %87 = vdwg.mxu0
  %v88 = vmax.f32 %v83, 0.0
  %v89 = vpack.c.bf16 %v88, %v88
  %v90 = vld [vmem:[%s3] sm:$0xf]
  %v91 = vld [vmem:[%s3 + $0x4] sm:$0xf]
  %v92 = vld [vmem:[%s3 + $0x8] sm:$0xf]
  %v93 = vld [vmem:[%s3 + $0xc] sm:$0xf]
  %v94 = vld [vmem:[%s3 + $0x10] sm:$0xf]
  %v95 = vld [vmem:[%s3 + $0x14] sm:$0xf]
  %v96 = vld [vmem:[%s3 + $0x18] sm:$0xf]
  %v97 = vld [vmem:[%s3 + $0x1c] sm:$0xf]
  %v98 = vld [vmem:[%s4] sm:$0x1]
  %v100 = vlaneseq
  %v101 = vshrl.u32 %v100, 7
  %v102 = vsub.s32 0, %v101
  %v103 = vrot.slane %v98, %v102
  %v113 = vunpack.c.l.b16 %v90
  %v114 = vunpack.c.l.b16 %v91
  %v115 = vunpack.c.l.b16 %v92
  %v116 = vunpack.c.l.b16 %v93
  %v117 = vunpack.c.l.b16 %v94
  %v118 = vunpack.c.l.b16 %v95
  %v119 = vunpack.c.l.b16 %v96
  %v120 = vunpack.c.l.b16 %v97
  %v121 = vpack.c.b16 %v114, %v113
  %v122 = vpack.c.b16 %v116, %v115
  %v123 = vpack.c.b16 %v118, %v117
  %v124 = vpack.c.b16 %v120, %v119
  %vm129 = vcmask 523264
  %v131 = vsel %vm129, %v89, 0
  %133 = vmatprep.subr.bf16.mxu0 0
  %134 = vmatpush1.bf16.msra.mxu0 %v121
  %135 = vmatprep.subr.bf16.mxu0 0
  %136 = vmatpush1.bf16.msra.mxu0 %v122
  %137 = vmatprep.subr.bf16.mxu0 0
  %138 = vmatpush1.bf16.msra.mxu0 %v123
  %139 = vmatprep.subr.bf16.mxu0 0
  %140 = vmatpush1.bf16.msra.mxu0 %v124
  %141 = vmatprep.subr.bf16.mxu0 0
  %142 = vmatpush1.bf16.msra.mxu0 0
  %143 = vmatprep.subr.bf16.mxu0 0
  %144 = vmatpush1.bf16.msra.mxu0 0
  %145 = vmatprep.subr.bf16.mxu0 0
  %146 = vmatpush1.bf16.msra.mxu0 0
  %147 = vmatprep.subr.bf16.mxu0 0
  %148 = vmatpush1.bf16.msra.mxu0 0
  %149 = vmatprep.subr.bf16.mxu0 0
  %150 = vmatpush1.bf16.msra.mxu0 0
  %151 = vmatprep.subr.bf16.mxu0 0
  %152 = vmatpush1.bf16.msra.mxu0 0
  %153 = vmatprep.subr.bf16.mxu0 0
  %154 = vmatpush1.bf16.msra.mxu0 0
  %155 = vmatprep.subr.bf16.mxu0 0
  %156 = vmatpush1.bf16.msra.mxu0 0
  %157 = vmatprep.subr.bf16.mxu0 0
  %158 = vmatpush1.bf16.msra.mxu0 0
  %159 = vmatprep.subr.bf16.mxu0 0
  %160 = vmatpush1.bf16.msra.mxu0 0
  %161 = vmatprep.subr.bf16.mxu0 0
  %162 = vmatpush1.bf16.msra.mxu0 0
  %163 = vmatprep.subr.bf16.mxu0 0
  %164 = vmatpush1.bf16.msra.mxu0 0
  %165 = vmatprep.mubr.bf16.mxu0 0
  %166 = vmatmul.mubr.bf16.gmra.mrb[0].mxu0 %v131
  %v167 = vpop.f32.mrb[0].mxu0
  %v168 = vadd.f32 %v103, %v167
  %v169 = vpop.f32.mrb[0].mxu0
  %v170 = vpop.f32.mrb[0].mxu0
  %v171 = vpop.f32.mrb[0].mxu0
  %172 = vdwg.mxu0
  %v173 = vmax.f32 %v168, 0.0
  %v174 = vpack.c.bf16 %v173, %v173
  %v175 = vld [vmem:[%s5] sm:$0xf]
  %v176 = vld [vmem:[%s5 + $0x4] sm:$0xf]
  %v177 = vld [vmem:[%s5 + $0x8] sm:$0xf]
  %v178 = vld [vmem:[%s5 + $0xc] sm:$0xf]
  %v179 = vld [vmem:[%s6] sm:$0x1]
  %v181 = vlaneseq
  %v182 = vshrl.u32 %v181, 7
  %v183 = vsub.s32 0, %v182
  %v184 = vrot.slane %v179, %v183
  %v190 = vunpack.c.l.b16 %v175
  %v191 = vunpack.c.l.b16 %v176
  %v192 = vunpack.c.l.b16 %v177
  %v193 = vunpack.c.l.b16 %v178
  %v194 = vpack.c.b16 %v191, %v190
  %v195 = vpack.c.b16 %v193, %v192
  %vm198 = vcmask 261120
  %v200 = vsel %vm198, %v174, 0
  %202 = vmatprep.subr.bf16.mxu0 0
  %203 = vmatpush1.bf16.msra.mxu0 %v194
  %204 = vmatprep.subr.bf16.mxu0 0
  %205 = vmatpush1.bf16.msra.mxu0 %v195
  %206 = vmatprep.subr.bf16.mxu0 0
  %207 = vmatpush1.bf16.msra.mxu0 0
  %208 = vmatprep.subr.bf16.mxu0 0
  %209 = vmatpush1.bf16.msra.mxu0 0
  %210 = vmatprep.subr.bf16.mxu0 0
  %211 = vmatpush1.bf16.msra.mxu0 0
  %212 = vmatprep.subr.bf16.mxu0 0
  %213 = vmatpush1.bf16.msra.mxu0 0
  %214 = vmatprep.subr.bf16.mxu0 0
  %215 = vmatpush1.bf16.msra.mxu0 0
  %216 = vmatprep.subr.bf16.mxu0 0
  %217 = vmatpush1.bf16.msra.mxu0 0
  %218 = vmatprep.subr.bf16.mxu0 0
  %219 = vmatpush1.bf16.msra.mxu0 0
  %220 = vmatprep.subr.bf16.mxu0 0
  %221 = vmatpush1.bf16.msra.mxu0 0
  %222 = vmatprep.subr.bf16.mxu0 0
  %223 = vmatpush1.bf16.msra.mxu0 0
  %224 = vmatprep.subr.bf16.mxu0 0
  %225 = vmatpush1.bf16.msra.mxu0 0
  %226 = vmatprep.subr.bf16.mxu0 0
  %227 = vmatpush1.bf16.msra.mxu0 0
  %228 = vmatprep.subr.bf16.mxu0 0
  %229 = vmatpush1.bf16.msra.mxu0 0
  %230 = vmatprep.subr.bf16.mxu0 0
  %231 = vmatpush1.bf16.msra.mxu0 0
  %232 = vmatprep.subr.bf16.mxu0 0
  %233 = vmatpush1.bf16.msra.mxu0 0
  %234 = vmatprep.mubr.bf16.mxu0 0
  %235 = vmatmul.mubr.bf16.gmra.mrb[0].mxu0 %v200
  %v236 = vpop.f32.mrb[0].mxu0
  %v237 = vadd.f32 %v184, %v236
  %v238 = vpop.f32.mrb[0].mxu0
  %v239 = vpop.f32.mrb[0].mxu0
  %v240 = vpop.f32.mrb[0].mxu0
  %241 = vdwg.mxu0
  %vm242 = vcmask 15360
  %243 = vst.msk [vmem:[%s7] sm:$0xff] %vm242, %v237
  // Predicated region
  $region30: #{simple_net_forward.1} parent=0 // pred_check
    _
  $region31: #{simple_net_forward.1} parent=0 // pred_check_branch
    %245 = sbr.rel (0) target = $region33
  $region32: #{simple_net_forward.1} parent=0 // pred_region
    _
  $region33: #{simple_net_forward.1} parent=0 // pred_fallthru
    _
  // Predicated region
  $region34: #{simple_net_forward.1} parent=0 // pred_check
    _
  $region35: #{simple_net_forward.1} parent=0 // pred_check_branch
    %247 = sbr.rel (0) target = $region37
  $region36: #{simple_net_forward.1} parent=0 // pred_region
    _
  $region37: #{simple_net_forward.1} parent=0 // pred_fallthru
    _

</llo_original>
